<compile_context>
chip_gen: v6e
topology: v6e:2x2x1
jax: 0.10.0
libtpu: 0.0.40
codegen_flags: <defaults>
</compile_context>

<pallas_src>
import functools

import numpy as np
import jax
import jax.numpy as jnp
from jax.experimental import pallas as pl
from jax.experimental.pallas import tpu as pltpu


def compute_pad(stride, k, s):
    if s % stride == 0:
        return max(k - stride, 0)
    return max(k - s % stride, 0)


def _round_up(v, m):
    return (v + m - 1) // m * m


def tsf_filters(center, delta, gamma, length):
    """Same math as TSF.get_filters (params tanh'd here).  `delta` only ever
    multiplies a zero vector in the reference, so it has no effect."""
    c = jnp.tanh(center)
    g = jnp.tanh(gamma)
    _ = jnp.tanh(delta)  # no effect on the produced filters (kept for fidelity)
    centers = (length - 1) * (c + 1.0) / 2.0               # (N,)
    gammas = jnp.exp(1.5 - 2.0 * jnp.abs(g))               # (N,)
    t = jnp.arange(length, dtype=jnp.float32)              # (L,)
    f = (t[None, :] - centers[:, None]) / gammas[:, None]
    f = 1.0 / (jnp.pi * gammas[:, None] * (f * f + 1.0))
    f = f / (jnp.sum(f, axis=1, keepdims=True) + 1e-6)
    return f                                               # (N, L)


def prepare_contsubconv(center, delta, gamma, w, b, *, C, num_f, length,
                        mxu_dtype=jnp.bfloat16):
    """One-time constant prep (depends only on the module parameters).

    Returns (kmat, w_pad, b_pad):
      kmat  (NCp, L*C_pad) mxu_dtype : kron(Cauchy filters, I_C), rows n*C + c
      w_pad (CLSp, NCp)    mxu_dtype : 1x1 Conv1d weight, zero-padded
      b_pad (CLSp, 1)      float32   : 1x1 Conv1d bias, zero-padded
    Call this ONCE per parameter set (model load / optimizer step), NOT per
    forward call -- this hoists all constant prep off the per-call path.
    """
    N, L = num_f, length
    classes = w.shape[0]
    C_pad = _round_up(C, 8)
    NC = N * C
    NCp = _round_up(NC, 8)
    CLSp = _round_up(classes, 8)

    filt = tsf_filters(center, delta, gamma, L)            # (N, L)
    eye = jnp.eye(C, C_pad, dtype=jnp.float32)             # (C, C_pad)
    # K[n*C + c, l*C_pad + c'] = filt[n, l] * (c == c')
    kmat = jnp.einsum("nl,cd->ncld", filt, eye).reshape(NC, L * C_pad)
    kmat = jnp.pad(kmat, ((0, NCp - NC), (0, 0))).astype(mxu_dtype)

    w_pad = jnp.zeros((CLSp, NCp), mxu_dtype).at[:classes, :NC].set(
        w.astype(mxu_dtype))
    b_pad = jnp.zeros((CLSp, 1), jnp.float32).at[:classes, 0].set(
        b.astype(jnp.float32))
    return kmat, w_pad, b_pad


def _contsubconv_kernel(xt_ref, xh_ref, k_ref, w_ref, b_ref, out_ref, win_ref,
                        *, L, C_pad, TILE, mxu_dtype):
    # xt_ref : (C_pad, TILE)    current lane tile of the x slab (per-batch halo layout)
    # xh_ref : (C_pad, 128)     the 128 columns following the tile (halo, may be zeros)
    # k_ref  : (NCp, L*C_pad)   kron(filters, I_C)            [mxu_dtype]
    # w_ref  : (CLSp, NCp)      1x1 Conv1d classifier weight  [mxu_dtype]
    # b_ref  : (CLSp, 1)        1x1 Conv1d classifier bias    [f32]
    # out_ref: (CLSp, TILE)     lane-dense output tile (unmasked vst)
    # win_ref: (L*C_pad, TILE)  f32 scratch: per-tap window stack

    # Build the window stack: row l*C_pad + c, col j  ->  xflat[c, tile_start + j + l].
    # No masking needed: the per-batch halo is pre-zeroed in the slab layout.
    win_ref[0:C_pad, :] = xt_ref[...]
    for l in range(1, L):                       # L is small & static -> unrolled
        r0 = l * C_pad
        win_ref[r0:r0 + C_pad, 0:TILE - l] = xt_ref[:, pl.ds(l, TILE - l)]
        win_ref[r0:r0 + C_pad, TILE - l:TILE] = xh_ref[:, pl.ds(0, l)]

    win = win_ref[...].astype(mxu_dtype)

    # Depthwise temporal conv as one MXU matmul (bf16 operands, f32 accumulate).
    sub = jnp.dot(k_ref[...], win, preferred_element_type=jnp.float32)   # (NCp, TILE)

    # ReLU (nn.Dropout is identity at inference) + 1x1 Conv1d classifier.
    cls = jnp.maximum(sub, 0.0).astype(mxu_dtype)
    out = jnp.dot(w_ref[...], cls, preferred_element_type=jnp.float32)   # (CLSp, TILE)
    out_ref[...] = (out + b_ref[...]).astype(out_ref.dtype)


def cont_sub_conv(x, kmat, w_pad, b_pad, *, classes, length, lane_tile=1024):
    """Forward pass of ContSubConv.  x: (B, C, T) float32 -> (B, classes, T).
    kmat/w_pad/b_pad come from prepare_contsubconv (computed once)."""
    B, C, T = x.shape
    L = length
    p = compute_pad(1, L, T)                 # = L - 1 for stride 1
    pad_f = p // 2
    pad_b = p - pad_f
    S = T + p                                # per-batch segment width (incl. zero halo)
    C_pad = kmat.shape[1] // L
    NCp = kmat.shape[0]
    CLSp = w_pad.shape[0]

    BT_S = B * S
    TILE = min(_round_up(lane_tile, 128), _round_up(BT_S, 128))
    Xp = _round_up(BT_S, TILE)               # lane-dense output slab width
    n_tiles = Xp // TILE
    Xw = Xp + 128                            # +128 zero cols: halo block of the last tile

    # ---- single fused relayout (the only per-call wrapper work on x) -------
    # (B,C,T) -> channel-major, per-batch halo, lane-dense (C_pad, Xw).
    # x[b, c, t] lands at column b*S + pad_f + t; everything else is zero.
    xt = jnp.transpose(x.astype(jnp.float32), (1, 0, 2))                  # (C, B, T)
    xs = jnp.pad(xt, ((0, C_pad - C), (0, 0), (pad_f, pad_b)))            # (C_pad, B, S)
    xflat = jnp.pad(xs.reshape(C_pad, BT_S), ((0, 0), (0, Xw - BT_S)))    # (C_pad, Xw)

    kern = functools.partial(_contsubconv_kernel, L=L, C_pad=C_pad, TILE=TILE,
                             mxu_dtype=kmat.dtype)
    hb = TILE // 128                         # halo block index stride (in 128-col blocks)
    out_slab = pl.pallas_call(
        kern,
        out_shape=jax.ShapeDtypeStruct((CLSp, Xp), jnp.float32),
        grid_spec=pltpu.PrefetchScalarGridSpec(
            num_scalar_prefetch=0,
            grid=(n_tiles,),                 # lane-tiled; parallel across TCs on v7x
            in_specs=[
                pl.BlockSpec((C_pad, TILE), lambda i: (0, i)),            # x tile
                pl.BlockSpec((C_pad, 128), lambda i: (0, (i + 1) * hb)),  # x halo (next 128)
                pl.BlockSpec((NCp, L * C_pad), lambda i: (0, 0)),         # kron(filters, I)
                pl.BlockSpec((CLSp, NCp), lambda i: (0, 0)),              # classifier W
                pl.BlockSpec((CLSp, 1), lambda i: (0, 0)),                # classifier b
            ],
            out_specs=pl.BlockSpec((CLSp, TILE), lambda i: (0, i)),
            scratch_shapes=[pltpu.VMEM((L * C_pad, TILE), jnp.float32)],
        ),
        compiler_params=pltpu.CompilerParams(
            dimension_semantics=("parallel",)),
    )(xflat, xflat, kmat, w_pad, b_pad)

    # Invariant: slab columns with (col % S) >= T, columns >= B*S, and rows
    # >= classes hold junk (bias-only / zero values) -- they MUST be sliced
    # away here; never consume out_slab directly.
    out = out_slab[:classes, :BT_S].reshape(classes, B, S)[:, :, :T]
    return jnp.transpose(out, (1, 0, 2))


def reference(x, center, delta, gamma, w, b, *, num_f, length,
              op_dtype=jnp.float32):
    """Pure-JAX reference mirroring the PyTorch forward.  `op_dtype` rounds the
    matmul operands the same way the kernel does (bf16 on the MXU), so the
    tight comparison isolates kernel bugs from the intentional bf16 cast."""
    B, C, T = x.shape
    p = compute_pad(1, length, T)
    xpad = jnp.pad(x.astype(jnp.float32), ((0, 0), (0, 0), (p // 2, p - p // 2)))
    filt = tsf_filters(center, delta, gamma, length)
    xpad = xpad.astype(op_dtype).astype(jnp.float32)
    filt = filt.astype(op_dtype).astype(jnp.float32)
    sub = jnp.zeros((B, num_f, C, T), jnp.float32)
    for l in range(length):
        sub = sub + filt[None, :, None, l:l + 1] * xpad[:, None, :, l:l + T]
    sub = sub.reshape(B, num_f * C, T)
    cls = jnp.maximum(sub, 0.0).astype(op_dtype).astype(jnp.float32)
    wq = w.astype(jnp.float32).astype(op_dtype).astype(jnp.float32)
    out = jnp.einsum("km,bmt->bkt", wq, cls, precision=jax.lax.Precision.HIGHEST)
    return out + b.astype(jnp.float32)[None, :, None]


if __name__ == "__main__":
    # Small shapes consistent with ContSubConv(inp=4, num_f=6, length=5, classes=3)
    B, C, T = 2, 4, 16
    num_f, length, classes = 6, 5, 3

    key = jax.random.PRNGKey(0)
    ks = jax.random.split(key, 6)
    x = jax.random.normal(ks[0], (B, C, T), jnp.float32)
    # TSF parameter init: normal_(0, 0.5) / (0, 0.01) / (0, 0.0001)
    center = 0.5 * jax.random.normal(ks[1], (num_f,), jnp.float32)
    delta = 0.01 * jax.random.normal(ks[2], (num_f,), jnp.float32)
    gamma = 0.0001 * jax.random.normal(ks[3], (num_f,), jnp.float32)
    # classify = nn.Conv1d(num_f*inp, classes, 1): weight (classes, num_f*C), bias (classes,)
    w = 0.1 * jax.random.normal(ks[4], (classes, num_f * C), jnp.float32)
    b = 0.1 * jax.random.normal(ks[5], (classes,), jnp.float32)

    # One-time constant prep (per parameter set, NOT per forward call).
    kmat, w_pad, b_pad = prepare_contsubconv(center, delta, gamma, w, b,
                                             C=C, num_f=num_f, length=length)

    fwd = jax.jit(functools.partial(cont_sub_conv, classes=classes, length=length))
    out = jax.block_until_ready(fwd(x, kmat, w_pad, b_pad))
    assert out.shape == (B, classes, T)

    # Matched-operand-precision reference (kernel-bug check, tight tolerance).
    ref_bf = reference(x, center, delta, gamma, w, b, num_f=num_f, length=length,
                       op_dtype=jnp.bfloat16)
    np.testing.assert_allclose(np.asarray(out), np.asarray(ref_bf),
                               rtol=1e-2, atol=1e-2)
    # Pure-f32 reference: bounds the (intentional) bf16 operand-rounding drift.
    ref_f32 = reference(x, center, delta, gamma, w, b, num_f=num_f, length=length)
    np.testing.assert_allclose(np.asarray(out), np.asarray(ref_f32),
                               rtol=5e-2, atol=5e-2)

    print("KERNEL_OK")
</pallas_src>

<mosaic_0001>
module attributes {stable_mosaic.version = 11 : i64} {
  func.func @_contsubconv_kernel(%arg0: i32, %arg1: memref<8x128xf32, #tpu.memory_space<vmem>>, %arg2: memref<8x128xf32, #tpu.memory_space<vmem>>, %arg3: memref<24x40xbf16, #tpu.memory_space<vmem>>, %arg4: memref<8x24xbf16, #tpu.memory_space<vmem>>, %arg5: memref<8x1xf32, #tpu.memory_space<vmem>>, %arg6: memref<8x128xf32, #tpu.memory_space<vmem>>, %arg7: memref<40x128xf32, #tpu.memory_space<vmem>>) attributes {dimension_semantics = [#tpu.dimension_semantics<parallel>], iteration_bounds = array<i64: 1>, scalar_prefetch = 0 : i64, scratch_operands = 1 : i64, tpu.core_type = #tpu.core_type<tc>, window_params = [{transform_indices = @transform_0, window_bounds = array<i64: 8, 128>}, {transform_indices = @transform_1, window_bounds = array<i64: 8, 128>}, {pipeline_mode = #tpu.pipeline_mode<synchronous>, transform_indices = @transform_2, window_bounds = array<i64: 24, 40>}, {pipeline_mode = #tpu.pipeline_mode<synchronous>, transform_indices = @transform_3, window_bounds = array<i64: 8, 24>}, {pipeline_mode = #tpu.pipeline_mode<synchronous>, transform_indices = @transform_4, window_bounds = array<i64: 8, 1>}, {transform_indices = @transform_5, window_bounds = array<i64: 8, 128>}]} {
    %c0 = arith.constant 0 : index
    %c0_0 = arith.constant 0 : index
    %0 = vector.load %arg1[%c0, %c0_0] : memref<8x128xf32, #tpu.memory_space<vmem>>, vector<8x128xf32>
    %c0_1 = arith.constant 0 : index
    %c0_2 = arith.constant 0 : index
    %1 = vector.load %arg7[%c0_1, %c0_2] : memref<40x128xf32, #tpu.memory_space<vmem>>, vector<8x128xf32>
    tpu.vector_store %arg7[%c0_1, %c0_2], %0 {strides = array<i32>} : memref<40x128xf32, #tpu.memory_space<vmem>>, vector<8x128xf32>,
    %c0_3 = arith.constant 0 : index
    %c1 = arith.constant 1 : index
    %2 = vector.load %arg1[%c0_3, %c1] : memref<8x128xf32, #tpu.memory_space<vmem>>, vector<8x127xf32>
    %c8 = arith.constant 8 : index
    %c0_4 = arith.constant 0 : index
    %3 = vector.load %arg7[%c8, %c0_4] : memref<40x128xf32, #tpu.memory_space<vmem>>, vector<8x127xf32>
    tpu.vector_store %arg7[%c8, %c0_4], %2 {strides = array<i32>} : memref<40x128xf32, #tpu.memory_space<vmem>>, vector<8x127xf32>,
    %c0_5 = arith.constant 0 : index
    %c0_6 = arith.constant 0 : index
    %4 = vector.load %arg2[%c0_5, %c0_6] : memref<8x128xf32, #tpu.memory_space<vmem>>, vector<8x1xf32>
    %c8_7 = arith.constant 8 : index
    %c127 = arith.constant 127 : index
    %5 = vector.load %arg7[%c8_7, %c127] : memref<40x128xf32, #tpu.memory_space<vmem>>, vector<8x1xf32>
    tpu.vector_store %arg7[%c8_7, %c127], %4 {strides = array<i32>} : memref<40x128xf32, #tpu.memory_space<vmem>>, vector<8x1xf32>,
    %c0_8 = arith.constant 0 : index
    %c2 = arith.constant 2 : index
    %6 = vector.load %arg1[%c0_8, %c2] : memref<8x128xf32, #tpu.memory_space<vmem>>, vector<8x126xf32>
    %c16 = arith.constant 16 : index
    %c0_9 = arith.constant 0 : index
    %7 = vector.load %arg7[%c16, %c0_9] : memref<40x128xf32, #tpu.memory_space<vmem>>, vector<8x126xf32>
    tpu.vector_store %arg7[%c16, %c0_9], %6 {strides = array<i32>} : memref<40x128xf32, #tpu.memory_space<vmem>>, vector<8x126xf32>,
    %c0_10 = arith.constant 0 : index
    %c0_11 = arith.constant 0 : index
    %8 = vector.load %arg2[%c0_10, %c0_11] : memref<8x128xf32, #tpu.memory_space<vmem>>, vector<8x2xf32>
    %c16_12 = arith.constant 16 : index
    %c126 = arith.constant 126 : index
    %9 = vector.load %arg7[%c16_12, %c126] : memref<40x128xf32, #tpu.memory_space<vmem>>, vector<8x2xf32>
    tpu.vector_store %arg7[%c16_12, %c126], %8 {strides = array<i32>} : memref<40x128xf32, #tpu.memory_space<vmem>>, vector<8x2xf32>,
    %c0_13 = arith.constant 0 : index
    %c3 = arith.constant 3 : index
    %10 = vector.load %arg1[%c0_13, %c3] : memref<8x128xf32, #tpu.memory_space<vmem>>, vector<8x125xf32>
    %c24 = arith.constant 24 : index
    %c0_14 = arith.constant 0 : index
    %11 = vector.load %arg7[%c24, %c0_14] : memref<40x128xf32, #tpu.memory_space<vmem>>, vector<8x125xf32>
    tpu.vector_store %arg7[%c24, %c0_14], %10 {strides = array<i32>} : memref<40x128xf32, #tpu.memory_space<vmem>>, vector<8x125xf32>,
    %c0_15 = arith.constant 0 : index
    %c0_16 = arith.constant 0 : index
    %12 = vector.load %arg2[%c0_15, %c0_16] : memref<8x128xf32, #tpu.memory_space<vmem>>, vector<8x3xf32>
    %c24_17 = arith.constant 24 : index
    %c125 = arith.constant 125 : index
    %13 = vector.load %arg7[%c24_17, %c125] : memref<40x128xf32, #tpu.memory_space<vmem>>, vector<8x3xf32>
    tpu.vector_store %arg7[%c24_17, %c125], %12 {strides = array<i32>} : memref<40x128xf32, #tpu.memory_space<vmem>>, vector<8x3xf32>,
    %c0_18 = arith.constant 0 : index
    %c4 = arith.constant 4 : index
    %14 = vector.load %arg1[%c0_18, %c4] : memref<8x128xf32, #tpu.memory_space<vmem>>, vector<8x124xf32>
    %c32 = arith.constant 32 : index
    %c0_19 = arith.constant 0 : index
    %15 = vector.load %arg7[%c32, %c0_19] : memref<40x128xf32, #tpu.memory_space<vmem>>, vector<8x124xf32>
    tpu.vector_store %arg7[%c32, %c0_19], %14 {strides = array<i32>} : memref<40x128xf32, #tpu.memory_space<vmem>>, vector<8x124xf32>,
    %c0_20 = arith.constant 0 : index
    %c0_21 = arith.constant 0 : index
    %16 = vector.load %arg2[%c0_20, %c0_21] : memref<8x128xf32, #tpu.memory_space<vmem>>, vector<8x4xf32>
    %c32_22 = arith.constant 32 : index
    %c124 = arith.constant 124 : index
    %17 = vector.load %arg7[%c32_22, %c124] : memref<40x128xf32, #tpu.memory_space<vmem>>, vector<8x4xf32>
    tpu.vector_store %arg7[%c32_22, %c124], %16 {strides = array<i32>} : memref<40x128xf32, #tpu.memory_space<vmem>>, vector<8x4xf32>,
    %c0_23 = arith.constant 0 : index
    %c0_24 = arith.constant 0 : index
    %18 = vector.load %arg7[%c0_23, %c0_24] : memref<40x128xf32, #tpu.memory_space<vmem>>, vector<40x128xf32>
    %19 = arith.truncf %18 : vector<40x128xf32> to vector<40x128xbf16>
    %c0_25 = arith.constant 0 : index
    %c0_26 = arith.constant 0 : index
    %20 = vector.load %arg3[%c0_25, %c0_26] : memref<24x40xbf16, #tpu.memory_space<vmem>>, vector<24x40xbf16>
    %cst = arith.constant dense<0.000000e+00> : vector<24x128xf32>
    %21 = tpu.matmul %20, %19, %cst {dimension_numbers = #tpu.dot_dimension_numbers<[1], [0], [0], [1], [0, 0, 1, 1], [], []>} : vector<24x40xbf16>, vector<40x128xbf16>, vector<24x128xf32> -> vector<24x128xf32>
    %cst_27 = arith.constant 0.000000e+00 : f32
    %22 = vector.broadcast %cst_27 : f32 to vector<24x128xf32>
    %23 = arith.maximumf %21, %22 : vector<24x128xf32>
    %24 = arith.truncf %23 : vector<24x128xf32> to vector<24x128xbf16>
    %c0_28 = arith.constant 0 : index
    %c0_29 = arith.constant 0 : index
    %25 = vector.load %arg4[%c0_28, %c0_29] : memref<8x24xbf16, #tpu.memory_space<vmem>>, vector<8x24xbf16>
    %cst_30 = arith.constant dense<0.000000e+00> : vector<8x128xf32>
    %26 = tpu.matmul %25, %24, %cst_30 {dimension_numbers = #tpu.dot_dimension_numbers<[1], [0], [0], [1], [0, 0, 1, 1], [], []>} : vector<8x24xbf16>, vector<24x128xbf16>, vector<8x128xf32> -> vector<8x128xf32>
    %c0_31 = arith.constant 0 : index
    %c0_32 = arith.constant 0 : index
    %27 = vector.load %arg5[%c0_31, %c0_32] : memref<8x1xf32, #tpu.memory_space<vmem>>, vector<8x1xf32>
    %28 = vector.broadcast %27 : vector<8x1xf32> to vector<8x128xf32>
    %29 = arith.addf %26, %28 : vector<8x128xf32>
    %c0_33 = arith.constant 0 : index
    %c0_34 = arith.constant 0 : index
    %30 = vector.load %arg6[%c0_33, %c0_34] : memref<8x128xf32, #tpu.memory_space<vmem>>, vector<8x128xf32>
    tpu.vector_store %arg6[%c0_33, %c0_34], %29 {strides = array<i32>} : memref<8x128xf32, #tpu.memory_space<vmem>>, vector<8x128xf32>,
    return
  }
  func.func @transform_0(%arg0: i32) -> (i32, i32) {
    %c0_i32 = arith.constant 0 : i32
    %c0_i32_0 = arith.constant 0 : i32
    return %c0_i32, %arg0 : i32, i32
  }
  func.func @transform_1(%arg0: i32) -> (i32, i32) {
    %c1_i32 = arith.constant 1 : i32
    %0 = arith.addi %arg0, %c1_i32 : i32
    %c1_i32_0 = arith.constant 1 : i32
    %1 = arith.muli %0, %c1_i32_0 : i32
    %c0_i32 = arith.constant 0 : i32
    %c0_i32_1 = arith.constant 0 : i32
    return %c0_i32, %1 : i32, i32
  }
  func.func @transform_2(%arg0: i32) -> (i32, i32) {
    %c0_i32 = arith.constant 0 : i32
    %c0_i32_0 = arith.constant 0 : i32
    %c0_i32_1 = arith.constant 0 : i32
    return %c0_i32, %c0_i32_0 : i32, i32
  }
  func.func @transform_3(%arg0: i32) -> (i32, i32) {
    %c0_i32 = arith.constant 0 : i32
    %c0_i32_0 = arith.constant 0 : i32
    %c0_i32_1 = arith.constant 0 : i32
    return %c0_i32, %c0_i32_0 : i32, i32
  }
  func.func @transform_4(%arg0: i32) -> (i32, i32) {
    %c0_i32 = arith.constant 0 : i32
    %c0_i32_0 = arith.constant 0 : i32
    %c0_i32_1 = arith.constant 0 : i32
    return %c0_i32, %c0_i32_0 : i32, i32
  }
  func.func @transform_5(%arg0: i32) -> (i32, i32) {
    %c0_i32 = arith.constant 0 : i32
    %c0_i32_0 = arith.constant 0 : i32
    return %c0_i32, %arg0 : i32, i32
  }
}

</mosaic_0001>

<llo_original>
// kernel: cont_sub_conv.1
$region0: #{cont_sub_conv.1}
  #allocation0 [shape = 'u32[]', space=smem, size = 0x4, offset = 0x4, fixed_abs, tag = 'smem constant byte address 0x4 - core index']
  #allocation1 [shape = 'u32[144,128]{1,0:T(1,128)}', space=vmem, size = 0x12000, scoped, tag = 'internal scratch']
  #allocation2 [shape = 'f32[40,128]{1,0:T(8,128)}', space=vmem, size = 0x5000, scoped, tag = 'scratch operand']
  %s0 = inlined_call_operand.vmem [shape: f32[8,256], index: 0, kind: input, shape index: {}, may-alias: {0,1}]
  %s1 = inlined_call_operand.vmem [shape: f32[8,256], index: 1, kind: input, shape index: {}, may-alias: {0,1}]
  %s2 = inlined_call_operand.vmem [shape: bf16[24,40], index: 2, kind: input, shape index: {}]
  %s3 = inlined_call_operand.vmem [shape: bf16[8,24], index: 3, kind: input, shape index: {}]
  %s4 = inlined_call_operand.vmem [shape: f32[8,1], index: 4, kind: input, shape index: {}]
  %s5 = inlined_call_operand.vmem [shape: f32[8,128], index: 5, kind: output, shape index: {}]
  %s6 = sld [smem:[#allocation0]]
  $region30: #{cont_sub_conv.1} parent=0
    _
  %s8 = ssub.s32 1, %s6
  %s9 = scalar_select 0, %s8, %s6
  // Predicated region
  $region2: #{cont_sub_conv.1} parent=0 // pred_check
    _
  $region3: #{cont_sub_conv.1} parent=0 // pred_check_branch
    %11 = sbr.rel (0) target = $region5
  $region4: #{cont_sub_conv.1} parent=0 // pred_region
    _
  $region5: #{cont_sub_conv.1} parent=0 // pred_fallthru
    _
  // Predicated region
  $region6: #{cont_sub_conv.1} parent=0 // pred_check
    _
  $region7: #{cont_sub_conv.1} parent=0 // pred_check_branch
    %13 = sbr.rel (0) target = $region9
  $region8: #{cont_sub_conv.1} parent=0 // pred_region
    %s14 = sadd.s32 0, 1
    %p15 = scmp.lt.s32.totalorder %s14, 1
    %s16 = scalar_select %p15, %s14, 1
    %s17 = smul.addr %s16, 8
    %s18 = scalar_lea.vmem %s1, %s17
    %s19 = sadd.s32 0, 1
  $region9: #{cont_sub_conv.1} parent=0 // pred_fallthru
    _
  // Predicated region
  $region10: #{cont_sub_conv.1} parent=0 // pred_check
    _
  $region11: #{cont_sub_conv.1} parent=0 // pred_check_branch
    %21 = sbr.rel (0) target = $region13
  $region12: #{cont_sub_conv.1} parent=0 // pred_region
    _
  $region13: #{cont_sub_conv.1} parent=0 // pred_fallthru
    _
  // Predicated region
  $region14: #{cont_sub_conv.1} parent=0 // pred_check
    _
  $region15: #{cont_sub_conv.1} parent=0 // pred_check_branch
    %23 = sbr.rel (0) target = $region17
  $region16: #{cont_sub_conv.1} parent=0 // pred_region
    _
  $region17: #{cont_sub_conv.1} parent=0 // pred_fallthru
    _
  // Predicated region
  $region18: #{cont_sub_conv.1} parent=0 // pred_check
    _
  $region19: #{cont_sub_conv.1} parent=0 // pred_check_branch
    %25 = sbr.rel (0) target = $region21
  $region20: #{cont_sub_conv.1} parent=0 // pred_region
    _
  $region21: #{cont_sub_conv.1} parent=0 // pred_fallthru
    _
  %s26 = sadd.s32 0, 1
  %p27 = scmp.lt.s32.totalorder %s26, 1
  %s28 = scalar_select %p27, %s26, 1
  %s29 = smul.addr %s28, 8
  %s30 = scalar_lea.vmem %s1, %s29
  %s31 = sadd.s32 0, 1
  %p32 = scmp.lt.s32.totalorder %s31, 1
  %s33 = scalar_select %p32, %s31, 1
  %s34 = smul.addr %s33, 8
  %s35 = scalar_lea.vmem %s1, %s34
  %s36 = sadd.s32 0, 1
  %v38 = vld [vmem:[%s0] sm:$0xff]
  %39 = vst [vmem:[#allocation2] sm:$0xff] %v38
  %v40 = vld [vmem:[%s0] sm:$0xff]
  %42 = vrot.lane.b32.xlu0 %v40, 127
  %v43 = vpop.permute.xlu0 %42
  %vm45 = vcmask 1039360
  %46 = vst.msk [vmem:[#allocation2 + $0x8] sm:$0xff] %vm45, %v43
  %v47 = vld [vmem:[%s35] sm:$0xff]
  %49 = vrot.lane.b32.xlu0 %v47, 127
  %v50 = vpop.permute.xlu0 %49
  %vm52 = vcmask 1048568
  %53 = vst.msk [vmem:[#allocation2 + $0x8] sm:$0xff] %vm52, %v50
  %v54 = vld [vmem:[%s0] sm:$0xff]
  %56 = vrot.lane.b32.xlu0 %v54, 126
  %v57 = vpop.permute.xlu0 %56
  %vm59 = vcmask 1031168
  %60 = vst.msk [vmem:[#allocation2 + $0x10] sm:$0xff] %vm59, %v57
  %v61 = vld [vmem:[%s35] sm:$0xff]
  %63 = vrot.lane.b32.xlu0 %v61, 126
  %v64 = vpop.permute.xlu0 %63
  %vm66 = vcmask 1048560
  %67 = vst.msk [vmem:[#allocation2 + $0x10] sm:$0xff] %vm66, %v64
  %v68 = vld [vmem:[%s0] sm:$0xff]
  %70 = vrot.lane.b32.xlu0 %v68, 125
  %v71 = vpop.permute.xlu0 %70
  %vm73 = vcmask 1022976
  %74 = vst.msk [vmem:[#allocation2 + $0x18] sm:$0xff] %vm73, %v71
  %v75 = vld [vmem:[%s35] sm:$0xff]
  %77 = vrot.lane.b32.xlu0 %v75, 125
  %v78 = vpop.permute.xlu0 %77
  %vm80 = vcmask 1048552
  %81 = vst.msk [vmem:[#allocation2 + $0x18] sm:$0xff] %vm80, %v78
  %v82 = vld [vmem:[%s0] sm:$0xff]
  %84 = vrot.lane.b32.xlu0 %v82, 124
  %v85 = vpop.permute.xlu0 %84
  %vm87 = vcmask 1014784
  %88 = vst.msk [vmem:[#allocation2 + $0x20] sm:$0xff] %vm87, %v85
  %v89 = vld [vmem:[%s35] sm:$0xff]
  %91 = vrot.lane.b32.xlu0 %v89, 124
  %v92 = vpop.permute.xlu0 %91
  %vm94 = vcmask 1048544
  %95 = vst.msk [vmem:[#allocation2 + $0x20] sm:$0xff] %vm94, %v92
  %v96 = vld [vmem:[#allocation2] sm:$0xff]
  %v97 = vld [vmem:[#allocation2 + $0x8] sm:$0xff]
  %v98 = vld [vmem:[#allocation2 + $0x10] sm:$0xff]
  %v99 = vld [vmem:[#allocation2 + $0x18] sm:$0xff]
  %v100 = vld [vmem:[#allocation2 + $0x20] sm:$0xff]
  %v101 = vpack.c.bf16 %v97, %v96
  %v102 = vpack.c.bf16 %v99, %v98
  %v103 = vpack.c.bf16 %v100, %v100
  %v104 = vld [vmem:[%s2] sm:$0xf]
  %v105 = vld [vmem:[%s2 + $0x4] sm:$0xf]
  %v106 = vld [vmem:[%s2 + $0x8] sm:$0xf]
  %v110 = vunpack.c.l.b16 %v104
  %v111 = vunpack.c.l.b16 %v105
  %v112 = vunpack.c.l.b16 %v106
  %v113 = vpack.c.b16 %v111, %v110
  %v114 = vpack.c.b16 %v112, %v112
  %vm115 = vcmask 326656
  %v117 = vsel %vm115, %v113, 0
  %v120 = vsel %vm115, %v114, 0
  %vm122 = vcmask 1043456
  %v124 = vsel %vm122, %v103, 0
  %126 = vmatprep.subr.bf16.mxu0 0
  %127 = vmatpush1.bf16.msra.mxu0 0
  %128 = vmatprep.subr.bf16.mxu0 0
  %129 = vmatpush1.bf16.msra.mxu0 0
  %130 = vmatprep.subr.bf16.mxu0 0
  %131 = vmatpush1.bf16.msra.mxu0 0
  %132 = vmatprep.subr.bf16.mxu0 0
  %133 = vmatpush1.bf16.msra.mxu0 0
  %134 = vmatprep.subr.bf16.mxu0 0
  %135 = vmatpush1.bf16.msra.mxu0 0
  %136 = vmatprep.subr.bf16.mxu0 0
  %137 = vmatpush1.bf16.msra.mxu0 %v124
  %138 = vmatprep.subr.bf16.mxu0 0
  %139 = vmatpush1.bf16.msra.mxu0 %v102
  %140 = vmatprep.subr.bf16.mxu0 0
  %141 = vmatpush1.bf16.msra.mxu0 %v101
  %142 = vmatprep.subr.bf16.mxu0 0
  %143 = vmatpush2.bf16.msra.mxu0 0
  %144 = vmatprep.subr.bf16.mxu0 0
  %145 = vmatpush2.bf16.msra.mxu0 0
  %146 = vmatprep.subr.bf16.mxu0 0
  %147 = vmatpush2.bf16.msra.mxu0 0
  %148 = vmatprep.subr.bf16.mxu0 0
  %149 = vmatpush2.bf16.msra.mxu0 0
  %150 = vmatprep.subr.bf16.mxu0 0
  %151 = vmatpush2.bf16.msra.mxu0 0
  %152 = vmatprep.subr.bf16.mxu0 0
  %153 = vmatpush2.bf16.msra.mxu0 0
  %154 = vmatprep.subr.bf16.mxu0 0
  %155 = vmatpush2.bf16.msra.mxu0 0
  %156 = vmatprep.subr.bf16.mxu0 0
  %157 = vmatpush2.bf16.msra.mxu0 0
  %158 = vmatprep.mubr.bf16.mxu0 0
  %159 = vmatmul.mubr.bf16.gmra.mxu0 %v117
  %v160 = vpop.f32.mrf.mxu0
  %v161 = vadd.f32 0.0, %v160
  %v162 = vpop.f32.mrf.mxu0
  %v163 = vpop.f32.mrf.mxu0
  %v164 = vadd.f32 0.0, %v163
  %v165 = vpop.f32.mrf.mxu0
  %166 = vmatprep.mubr.bf16.mxu0 0
  %167 = vmatmul.mubr.bf16.gmra.mxu0 %v120
  %v168 = vpop.f32.mrf.mxu0
  %v169 = vadd.f32 0.0, %v168
  %v170 = vpop.f32.mrf.mxu0
  %v171 = vpop.f32.mrf.mxu0
  %v172 = vpop.f32.mrf.mxu0
  %173 = vdwg.mxu0
  %v174 = vmax.f32 %v161, 0.0
  %v175 = vmax.f32 %v164, 0.0
  %v176 = vmax.f32 %v169, 0.0
  %v177 = vpack.c.bf16 %v175, %v174
  %v178 = vpack.c.bf16 %v176, %v176
  %v179 = vld [vmem:[%s3] sm:$0xf]
  %v180 = vld [vmem:[%s4] sm:$0xff]
  %182 = vset.pattern.permute.xlu0 0
  %183 = vperm.xlu0 %182, %v180
  %v184 = vpop.permute.xlu0 %183
  %vm186 = vcmask 195584
  %v188 = vsel %vm186, %v179, 0
  %v191 = vsel %vm122, %v178, 0
  %193 = vmatprep.subr.bf16.mxu0 0
  %194 = vmatpush1.bf16.msra.mxu0 0
  %195 = vmatprep.subr.bf16.mxu0 0
  %196 = vmatpush1.bf16.msra.mxu0 0
  %197 = vmatprep.subr.bf16.mxu0 0
  %198 = vmatpush1.bf16.msra.mxu0 0
  %199 = vmatprep.subr.bf16.mxu0 0
  %200 = vmatpush1.bf16.msra.mxu0 0
  %201 = vmatprep.subr.bf16.mxu0 0
  %202 = vmatpush1.bf16.msra.mxu0 0
  %203 = vmatprep.subr.bf16.mxu0 0
  %204 = vmatpush1.bf16.msra.mxu0 0
  %205 = vmatprep.subr.bf16.mxu0 0
  %206 = vmatpush1.bf16.msra.mxu0 %v191
  %207 = vmatprep.subr.bf16.mxu0 0
  %208 = vmatpush1.bf16.msra.mxu0 %v177
  %209 = vmatprep.subr.bf16.mxu0 0
  %210 = vmatpush2.bf16.msra.mxu0 0
  %211 = vmatprep.subr.bf16.mxu0 0
  %212 = vmatpush2.bf16.msra.mxu0 0
  %213 = vmatprep.subr.bf16.mxu0 0
  %214 = vmatpush2.bf16.msra.mxu0 0
  %215 = vmatprep.subr.bf16.mxu0 0
  %216 = vmatpush2.bf16.msra.mxu0 0
  %217 = vmatprep.subr.bf16.mxu0 0
  %218 = vmatpush2.bf16.msra.mxu0 0
  %219 = vmatprep.subr.bf16.mxu0 0
  %220 = vmatpush2.bf16.msra.mxu0 0
  %221 = vmatprep.subr.bf16.mxu0 0
  %222 = vmatpush2.bf16.msra.mxu0 0
  %223 = vmatprep.subr.bf16.mxu0 0
  %224 = vmatpush2.bf16.msra.mxu0 0
  %225 = vmatprep.mubr.bf16.mxu0 0
  %226 = vmatmul.mubr.bf16.gmra.mxu0 %v188
  %v227 = vpop.f32.mrf.mxu0
  %v228 = vadd.f32 %v184, %v227
  %v229 = vpop.f32.mrf.mxu0
  %v230 = vpop.f32.mrf.mxu0
  %v231 = vpop.f32.mrf.mxu0
  %232 = vdwg.mxu0
  %233 = vst [vmem:[%s5] sm:$0xff] %v228
  // Predicated region
  $region22: #{cont_sub_conv.1} parent=0 // pred_check
    _
  $region23: #{cont_sub_conv.1} parent=0 // pred_check_branch
    %235 = sbr.rel (0) target = $region25
  $region24: #{cont_sub_conv.1} parent=0 // pred_region
    _
  $region25: #{cont_sub_conv.1} parent=0 // pred_fallthru
    _
  // Predicated region
  $region26: #{cont_sub_conv.1} parent=0 // pred_check
    _
  $region27: #{cont_sub_conv.1} parent=0 // pred_check_branch
    %237 = sbr.rel (0) target = $region29
  $region28: #{cont_sub_conv.1} parent=0 // pred_region
    _
  $region29: #{cont_sub_conv.1} parent=0 // pred_fallthru
    _

</llo_original>
